<compile_context>
chip_gen: v6e
topology: v6e:2x2x1
jax: 0.10.0
libtpu: 0.0.40
codegen_flags: <defaults>
</compile_context>

<pallas_src>
import functools
import itertools
import math

import numpy as np
import jax
import jax.numpy as jnp
from jax.experimental import pallas as pl
from jax.experimental.pallas import tpu as pltpu


def _get_tuple_n(x, n, tp):
    assert tp is not list
    if isinstance(x, tp):
        x = [x] * n
    assert len(x) == n, "Parameters should be {} or list of N elements.".format(tp)
    for i in x:
        assert isinstance(i, tp), "Elements of list should be {}.".format(tp)
    return list(x)


def _round_up(x, m):
    return ((x + m - 1) // m) * m


def _tpu_vmem_capacity_bytes():
    """Physical VMEM per core; conservative fallback if the query fails."""
    try:
        info = pltpu.get_tpu_info()
        cap = int(getattr(info, "vmem_capacity_bytes", 0))
        if cap > 0:
            return cap
    except Exception:
        pass
    return 64 * 1024 * 1024          # v7x per-core VMEM (smallest of the fleet)


_VMEM_CAP = _tpu_vmem_capacity_bytes()
# Scoped VMEM handed to Mosaic: leave headroom below the physical capacity
# (v5e/v6e: 96 MiB of 128; v7x: 48 MiB of 64).
_VMEM_LIMIT = min(_VMEM_CAP * 3 // 4, 96 * 1024 * 1024)
# Per-grid-step working-set target (double-buffered I/O + f32 intermediates).
_TILE_BUDGET = min(_VMEM_CAP // 4, 32 * 1024 * 1024)


def _pick_row_tile(m, vmem_row_bytes, budget_bytes, min_grid=1):
    """Sublane-aligned row tile (multiple of 8, or the full extent) sized so the
    per-step VMEM working set stays within budget; when the problem is large,
    keep at least `min_grid` grid steps (v7x has 2 TCs sharding parallel axes).
    """
    if m <= 8:
        return m
    t = max(8, budget_bytes // max(vmem_row_bytes, 1))
    if min_grid > 1 and m >= min_grid * 256:
        t = min(t, _round_up((m + min_grid - 1) // min_grid, 8))
    t = max(8, (t // 8) * 8)
    return m if t >= m else t


@functools.lru_cache(maxsize=None)
def _exclude_self_mask_np(n, arity):
    """(n**(arity-1), n) keep-mask: 1 where all `arity` node indices differ."""
    grids = np.meshgrid(*([np.arange(n)] * arity), indexing="ij")
    keep = np.ones((n,) * arity, dtype=bool)
    for a in range(arity):
        for b in range(a + 1, arity):
            keep &= grids[a] != grids[b]
    return keep.reshape(int(n) ** (arity - 1), n)


# ---------------------------------------------------------------------------
# Pallas kernel 1: LogicInference  (Linear -> ReLU -> Linear -> Sigmoid)
# ---------------------------------------------------------------------------
def _mlp_sigmoid_kernel(x_ref, w1_ref, b1_ref, w2_ref, b2_ref, o_ref):
    x = x_ref[...].astype(jnp.bfloat16)                                # (TM, Cin)
    h = jnp.dot(x, w1_ref[...], preferred_element_type=jnp.float32)   # f32 acc
    h = jnp.maximum(h + b1_ref[...], 0.0)                             # f32 epilogue
    y = jnp.dot(h.astype(jnp.bfloat16), w2_ref[...],
                preferred_element_type=jnp.float32)                   # (TM, out)
    o_ref[...] = jax.nn.sigmoid(y + b2_ref[...]).astype(o_ref.dtype)  # bf16, valid cols only


def logic_inference(x, params):
    """Apply the MLP+sigmoid logic model along the last (channel) dim."""
    w1, b1, w2, b2 = params
    lead = x.shape[:-1]
    cin = x.shape[-1]
    x2d = x.reshape(-1, cin)            # no dtype pass here: cast happens in-kernel
    m = x2d.shape[0]
    hp = w1.shape[1]
    out_dim = w2.shape[1]

    # Per-row VMEM footprint (lane-padded), incl. double-buffered I/O tiles and
    # the f32 hidden / pre-sigmoid intermediates.
    x_row = _round_up(cin, 128) * x2d.dtype.itemsize
    o_row = _round_up(out_dim, 128) * 2
    mid_row = hp * (4 + 2) + _round_up(out_dim, 128) * 4
    row_bytes = 2 * (x_row + o_row) + mid_row
    tm = _pick_row_tile(m, row_bytes, _TILE_BUDGET, min_grid=4)
    grid = (pl.cdiv(m, tm),)

    flops = 2 * m * (cin * hp + hp * out_dim)
    bytes_accessed = (m * cin * x2d.dtype.itemsize
                      + w1.size * 2 + w2.size * 2
                      + (hp + out_dim) * 4 + m * out_dim * 2)

    y = pl.pallas_call(
        _mlp_sigmoid_kernel,
        out_shape=jax.ShapeDtypeStruct((m, out_dim), jnp.bfloat16),
        grid=grid,
        in_specs=[
            # TODO(synk): add pipeline_mode=pl.Buffered(3) here if profiling
            # still shows exposed DMA after the larger tiles.
            pl.BlockSpec((tm, cin), lambda i: (i, 0)),     # row-tiled activations
            pl.BlockSpec((cin, hp), lambda i: (0, 0)),     # resident weights
            pl.BlockSpec((1, hp), lambda i: (0, 0)),
            pl.BlockSpec((hp, out_dim), lambda i: (0, 0)),
            pl.BlockSpec((1, out_dim), lambda i: (0, 0)),
        ],
        out_specs=pl.BlockSpec((tm, out_dim), lambda i: (i, 0)),
        compiler_params=pltpu.CompilerParams(
            dimension_semantics=("parallel",),
            vmem_limit_bytes=_VMEM_LIMIT,
        ),
        cost_estimate=pl.CostEstimate(
            flops=flops, transcendentals=m * out_dim, bytes_accessed=bytes_accessed),
    )(x2d, w1, b1, w2, b2)
    return y.reshape(*lead, out_dim)


# ---------------------------------------------------------------------------
# Pallas kernel 2: Reducer (exists = masked max, forall = masked min over -2)
# ---------------------------------------------------------------------------
def _reduce_kernel(x_ref, o_ref):
    x = x_ref[...].astype(jnp.float32)                    # (1, TR, N, C)
    ex = jnp.max(x, axis=2)
    fa = jnp.min(x, axis=2)
    o_ref[...] = jnp.concatenate([ex, fa], axis=-1).astype(o_ref.dtype)


def _reduce_masked_kernel(x_ref, m_ref, o_ref):
    x = x_ref[...].astype(jnp.float32)                    # (1, TR, N, C)
    keep = (m_ref[...] != 0)[None, :, :, None]            # (1, TR, N, 1) bool
    # Matches NLM mask_value semantics: excluded -> 0 for exists, 1 for forall
    # (valid for post-sigmoid probabilities, as in the reference).
    ex = jnp.max(jnp.where(keep, x, 0.0), axis=2)
    fa = jnp.min(jnp.where(keep, x, 1.0), axis=2)
    o_ref[...] = jnp.concatenate([ex, fa], axis=-1).astype(o_ref.dtype)


def reducer(x, arity, exclude_self):
    """Reduce out the last node dim; returns blocked [exists | forall] bf16.

    NOTE: channel layout is blocked (ex_0..ex_{C-1}, fa_0..fa_{C-1}) rather than
    interleaved as in the torch reference; the consuming layer's w1 rows are
    permuted once at init to compensate, so the forward pass is equivalent.
    """
    c = x.shape[-1]
    n = x.shape[-2]
    lead = x.shape[:-2]

    use_mask = exclude_self and arity >= 2
    if use_mask:
        assert len(lead) == arity
        bq = lead[0]
        r = 1
        for d in lead[1:]:
            r *= d                      # = n ** (arity - 1)
        mask = jnp.asarray(_exclude_self_mask_np(n, arity), dtype=jnp.bfloat16)
    else:
        bq = 1
        r = 1
        for d in lead:
            r *= d
        mask = None
    xr = x.reshape(bq, r, n, c)

    # Per-r-row VMEM footprint: the (n, c) slab is lane/sublane padded to
    # (ceil(n/8)*8, ceil(c/128)*128); account for double-buffered I/O + f32 copy.
    slab = _round_up(n, 8) * _round_up(c, 128)
    x_row = slab * x.dtype.itemsize
    o_row = _round_up(2 * c, 128) * 2
    m_row = _round_up(n, 128) * 2 if use_mask else 0
    row_bytes = 2 * (x_row + o_row + m_row) + slab * 4
    tr = _pick_row_tile(r, row_bytes, _TILE_BUDGET, min_grid=4 if bq == 1 else 1)
    grid = (bq, pl.cdiv(r, tr))

    x_spec = pl.BlockSpec((1, tr, n, c), lambda b, i: (b, i, 0, 0))
    o_spec = pl.BlockSpec((1, tr, 2 * c), lambda b, i: (b, i, 0))
    cparams = pltpu.CompilerParams(
        dimension_semantics=("parallel", "parallel"),
        vmem_limit_bytes=_VMEM_LIMIT,
    )
    cost = pl.CostEstimate(
        flops=2 * xr.size, transcendentals=0,
        bytes_accessed=xr.size * xr.dtype.itemsize + bq * r * 2 * c * 2)
    out_shape = jax.ShapeDtypeStruct((bq, r, 2 * c), jnp.bfloat16)

    # TODO(synk): fold this reduction into the consuming MLP kernel (as a
    # preprocessing step on one w1 row-block's input) so the (bq, r, 2c)
    # intermediate never round-trips HBM and the lane-sparse (c << 128) tiles
    # disappear.
    if use_mask:
        m_spec = pl.BlockSpec((tr, n), lambda b, i: (i, 0))
        y = pl.pallas_call(
            _reduce_masked_kernel, out_shape=out_shape, grid=grid,
            in_specs=[x_spec, m_spec], out_specs=o_spec,
            compiler_params=cparams, cost_estimate=cost,
        )(xr, mask)
    else:
        y = pl.pallas_call(
            _reduce_kernel, out_shape=out_shape, grid=grid,
            in_specs=[x_spec], out_specs=o_spec,
            compiler_params=cparams, cost_estimate=cost,
        )(xr)

    return y.reshape(*lead, 2 * c)


# ---------------------------------------------------------------------------
# Plain-JAX glue: Expander / Permutation
# ---------------------------------------------------------------------------
def expander(x, target_arity, n=None):
    """Broadcast a (target_arity-1)-ary tensor to target_arity by adding a node dim."""
    dim = target_arity - 1
    if dim == 0:
        assert n is not None
    elif n is None:
        n = x.shape[dim]
    x = jnp.expand_dims(x, axis=dim + 1)
    out_shape = x.shape[: dim + 1] + (n,) + x.shape[dim + 2:]
    return jnp.broadcast_to(x, out_shape)


def permutation(x, dim):
    """Concatenate all permutations of the node dims along the channel dim."""
    if dim <= 1:
        return x
    nr_dims = x.ndim
    index = tuple(range(1, nr_dims - 1))
    start_dim = nr_dims - 1 - dim
    assert start_dim > 0
    res = []
    for perm in itertools.permutations(index[start_dim - 1:]):
        p = (0,) + index[: start_dim - 1] + perm + (nr_dims - 1,)
        res.append(jnp.transpose(x, p))
    return jnp.concatenate(res, axis=-1)


# ---------------------------------------------------------------------------
# LogicLayer
# ---------------------------------------------------------------------------
class LogicLayer:
    def __init__(self, breadth, input_dims, output_dims, logic_hidden_dim,
                 exclude_self=True, residual=False, key=None):
        assert breadth > 0, "Does not support breadth <= 0."
        self.max_order = breadth
        self.residual = residual
        self.exclude_self = exclude_self

        input_dims = _get_tuple_n(input_dims, breadth + 1, int)
        output_dims = _get_tuple_n(output_dims, breadth + 1, int)
        self.input_dims = input_dims

        # TODO(synk): logic_hidden_dim is supported as a single hidden width
        # (int or 1-element list); longer hidden stacks would chain more
        # matmuls inside the kernel.
        if isinstance(logic_hidden_dim, (list, tuple)):
            assert len(logic_hidden_dim) == 1
            hidden = int(logic_hidden_dim[0])
        else:
            hidden = int(logic_hidden_dim)

        key = jax.random.PRNGKey(0) if key is None else key
        self.params = []
        self.ref_w1 = []      # torch-convention (interleaved) w1, for cross-check only
        self.output_dims = []
        for i in range(breadth + 1):
            e_dim = input_dims[i - 1] if i > 0 else 0            # Expander
            s_dim = input_dims[i]                                # own input
            r_dim = 2 * input_dims[i + 1] if i + 1 < breadth + 1 else 0   # Reducer
            d_pre = e_dim + s_dim + r_dim
            if d_pre == 0:
                self.params.append(None)
                self.ref_w1.append(None)
                self.output_dims.append(0)
                continue
            n_perm = math.factorial(i)
            current_dim = d_pre * n_perm                          # Permutation

            key, k1, k2 = jax.random.split(key, 3)
            # Reference-convention weights (reducer channels interleaved ex/fa).
            w1 = (jax.random.normal(k1, (current_dim, hidden), jnp.float32)
                  * (1.0 / math.sqrt(current_dim)))
            b1 = jnp.zeros((hidden,), jnp.float32)
            w2 = (jax.random.normal(k2, (hidden, output_dims[i]), jnp.float32)
                  * (1.0 / math.sqrt(hidden)))
            b2 = jnp.zeros((output_dims[i],), jnp.float32)

            # Fold the reducer's exists/forall interleave into a one-time row
            # permutation of w1: the Pallas reducer emits blocked [ex | fa]
            # channels, so kernel row (e+s + g*C + k) must hold the reference
            # (interleaved) row (e+s + 2k + g), within each of the i! copies.
            if r_dim > 0:
                c_next = input_dims[i + 1]
                perm = []
                for copy in range(n_perm):
                    base = copy * d_pre
                    perm.extend(range(base, base + e_dim + s_dim))
                    for j in range(r_dim):
                        g, k = divmod(j, c_next)
                        perm.append(base + e_dim + s_dim + 2 * k + g)
                w1_kernel = w1[jnp.asarray(perm, dtype=jnp.int32), :]
            else:
                w1_kernel = w1

            # Pad only the HIDDEN width to a lane-dense multiple of 128 (the
            # zero columns are exact no-ops).  The output width is left
            # unpadded: the kernel stores only the valid out_dim columns.
            hp = _round_up(hidden, 128)
            w1p = jnp.zeros((current_dim, hp), jnp.float32).at[:, :hidden].set(w1_kernel)
            b1p = jnp.zeros((1, hp), jnp.float32).at[:, :hidden].set(b1)
            w2p = jnp.zeros((hp, output_dims[i]), jnp.float32).at[:hidden, :].set(w2)
            b2p = b2.reshape(1, output_dims[i])

            self.params.append((w1p.astype(jnp.bfloat16), b1p,
                                w2p.astype(jnp.bfloat16), b2p))
            w1rp = jnp.zeros((current_dim, hp), jnp.float32).at[:, :hidden].set(w1)
            self.ref_w1.append(w1rp.astype(jnp.bfloat16))
            self.output_dims.append(output_dims[i])

        if self.residual:
            for i in range(len(input_dims)):
                self.output_dims[i] += input_dims[i]

    def __call__(self, inputs):
        assert len(inputs) == self.max_order + 1
        outputs = []
        for i in range(self.max_order + 1):
            f = []
            if i > 0 and self.input_dims[i - 1] > 0:
                n = inputs[i].shape[1] if i == 1 else None
                # Cast BEFORE the broadcast so the materialized expansion is bf16.
                f.append(expander(inputs[i - 1].astype(jnp.bfloat16), i, n))
            if i < len(inputs) and self.input_dims[i] > 0:
                f.append(inputs[i].astype(jnp.bfloat16))
            if i + 1 < len(inputs) and self.input_dims[i + 1] > 0:
                f.append(reducer(inputs[i + 1], i + 1, self.exclude_self))  # bf16
            if len(f) == 0:
                output = None
            else:
                # TODO(synk): fuse the expander broadcast, this concat, and the
                # i! permutation copies into the MLP pallas_call (per-part
                # in_specs + w1 row-blocks with permuted index_maps) so the
                # widened activation never round-trips HBM.
                f_cat = jnp.concatenate(f, axis=-1)
                f_cat = permutation(f_cat, i)
                output = logic_inference(f_cat, self.params[i])
            if self.residual and self.input_dims[i] > 0:
                output = jnp.concatenate([inputs[i], output], axis=-1)
            outputs.append(output)
        return outputs

    # Pure-JAX mirror in the torch channel convention (interleaved exists/forall
    # reducer channels + unpermuted w1).  Numerical cross-check only.
    def reference_forward(self, inputs):
        def ref_reducer(x, arity, exclude):
            c = x.shape[-1]
            n = x.shape[-2]
            xf = x.astype(jnp.float32)
            if exclude and arity >= 2:
                keep = jnp.asarray(_exclude_self_mask_np(n, arity))
                keep = keep.reshape((1,) + x.shape[1:-1] + (1,))
                ex = jnp.max(jnp.where(keep, xf, 0.0), axis=-2)
                fa = jnp.min(jnp.where(keep, xf, 1.0), axis=-2)
            else:
                ex = jnp.max(xf, axis=-2)
                fa = jnp.min(xf, axis=-2)
            out = jnp.stack([ex, fa], axis=-1).reshape(ex.shape[:-1] + (2 * c,))
            return out.astype(jnp.bfloat16)

        def ref_mlp(x, w1, b1, w2, b2):
            x2 = x.reshape(-1, x.shape[-1]).astype(jnp.bfloat16)
            h = jnp.dot(x2, w1, preferred_element_type=jnp.float32)
            h = jnp.maximum(h + b1, 0.0)
            y = jnp.dot(h.astype(jnp.bfloat16), w2, preferred_element_type=jnp.float32)
            y = jax.nn.sigmoid(y + b2).astype(jnp.bfloat16)
            return y.reshape(x.shape[:-1] + (w2.shape[1],))

        outputs = []
        for i in range(self.max_order + 1):
            f = []
            if i > 0 and self.input_dims[i - 1] > 0:
                n = inputs[i].shape[1] if i == 1 else None
                f.append(expander(inputs[i - 1].astype(jnp.bfloat16), i, n))
            if i < len(inputs) and self.input_dims[i] > 0:
                f.append(inputs[i].astype(jnp.bfloat16))
            if i + 1 < len(inputs) and self.input_dims[i + 1] > 0:
                f.append(ref_reducer(inputs[i + 1], i + 1, self.exclude_self))
            if len(f) == 0:
                output = None
            else:
                f_cat = permutation(jnp.concatenate(f, axis=-1), i)
                _, b1, w2, b2 = self.params[i]
                output = ref_mlp(f_cat, self.ref_w1[i], b1, w2, b2)
            if self.residual and self.input_dims[i] > 0:
                output = jnp.concatenate([inputs[i], output], axis=-1)
            outputs.append(output)
        return outputs


if __name__ == "__main__":
    key = jax.random.PRNGKey(0)
    B, N = 2, 8
    C0 = C1 = C2 = 4
    OUT = 8
    k0, k1, k2, kp = jax.random.split(key, 4)

    in0 = jax.random.uniform(k0, (B, C0), dtype=jnp.float32)          # nullary
    in1 = jax.random.uniform(k1, (B, N, C1), dtype=jnp.float32)       # unary
    in2 = jax.random.uniform(k2, (B, N, N, C2), dtype=jnp.float32)    # binary

    layer = LogicLayer(breadth=2,
                       input_dims=[C0, C1, C2],
                       output_dims=OUT,
                       logic_hidden_dim=32,
                       exclude_self=True,
                       residual=False,
                       key=kp)

    outs = layer([in0, in1, in2])
    for o in outs:
        if o is not None:
            jax.block_until_ready(o)

    assert outs[0].shape == (B, OUT)
    assert outs[1].shape == (B, N, OUT)
    assert outs[2].shape == (B, N, N, OUT)
    assert all(bool(jnp.all(jnp.isfinite(o.astype(jnp.float32))))
               for o in outs if o is not None)

    # Cross-check against the pure-JAX torch-convention reference (bf16-induced
    # differences only; validates the blocked-reducer / w1-permutation fold).
    ref_outs = layer.reference_forward([in0, in1, in2])
    for o, r in zip(outs, ref_outs):
        if o is None:
            continue
        diff = float(jnp.max(jnp.abs(o.astype(jnp.float32) - r.astype(jnp.float32))))
        assert diff < 3e-2, "kernel/reference mismatch: {}".format(diff)

    print("KERNEL_OK")
</pallas_src>

<mosaic_0001>
module attributes {stable_mosaic.version = 11 : i64} {
  func.func @_reduce_kernel(%arg0: i32, %arg1: i32, %arg2: memref<1x2x8x4xf32, #tpu.memory_space<vmem>>, %arg3: memref<1x2x8xbf16, #tpu.memory_space<vmem>>) attributes {dimension_semantics = [#tpu.dimension_semantics<parallel>, #tpu.dimension_semantics<parallel>], iteration_bounds = array<i64: 1, 1>, scalar_prefetch = 0 : i64, scratch_operands = 0 : i64, tpu.core_type = #tpu.core_type<tc>, window_params = [{transform_indices = @transform_0, window_bounds = array<i64: 1, 2, 8, 4>}, {transform_indices = @transform_1, window_bounds = array<i64: 1, 2, 8>}]} {
    %c0 = arith.constant 0 : index
    %c0_0 = arith.constant 0 : index
    %c0_1 = arith.constant 0 : index
    %c0_2 = arith.constant 0 : index
    %0 = vector.load %arg2[%c0, %c0_0, %c0_1, %c0_2] : memref<1x2x8x4xf32, #tpu.memory_space<vmem>>, vector<1x2x8x4xf32>
    %cst = arith.constant dense<0xFF800000> : vector<1x2x4xf32>
    %1 = vector.multi_reduction <maximumf>, %0, %cst [2] : vector<1x2x8x4xf32> to vector<1x2x4xf32>
    %cst_3 = arith.constant dense<0x7F800000> : vector<1x2x4xf32>
    %2 = vector.multi_reduction <minimumf>, %0, %cst_3 [2] : vector<1x2x8x4xf32> to vector<1x2x4xf32>
    %3 = tpu.concatenate %1, %2 in 2 : vector<1x2x4xf32>, vector<1x2x4xf32> -> vector<1x2x8xf32>
    %4 = arith.truncf %3 : vector<1x2x8xf32> to vector<1x2x8xbf16>
    %c0_4 = arith.constant 0 : index
    %c0_5 = arith.constant 0 : index
    %c0_6 = arith.constant 0 : index
    %5 = vector.load %arg3[%c0_4, %c0_5, %c0_6] : memref<1x2x8xbf16, #tpu.memory_space<vmem>>, vector<1x2x8xbf16>
    tpu.vector_store %arg3[%c0_4, %c0_5, %c0_6], %4 {strides = array<i32>} : memref<1x2x8xbf16, #tpu.memory_space<vmem>>, vector<1x2x8xbf16>,
    return
  }
  func.func @transform_0(%arg0: i32, %arg1: i32) -> (i32, i32, i32, i32) {
    %c0_i32 = arith.constant 0 : i32
    %c0_i32_0 = arith.constant 0 : i32
    %c0_i32_1 = arith.constant 0 : i32
    return %arg0, %arg1, %c0_i32, %c0_i32_0 : i32, i32, i32, i32
  }
  func.func @transform_1(%arg0: i32, %arg1: i32) -> (i32, i32, i32) {
    %c0_i32 = arith.constant 0 : i32
    %c0_i32_0 = arith.constant 0 : i32
    return %arg0, %arg1, %c0_i32 : i32, i32, i32
  }
}

</mosaic_0001>

<llo_original>
// kernel: tpu_custom_call.1
$region0: #{tpu_custom_call.1}
  #allocation0 [shape = 'u32[]', space=smem, size = 0x4, offset = 0x4, fixed_abs, tag = 'smem constant byte address 0x4 - core index']
  #allocation1 [shape = 'u32[144,128]{1,0:T(1,128)}', space=vmem, size = 0x12000, scoped, tag = 'internal scratch']
  %s0 = inlined_call_operand.vmem [shape: f32[1,2,8,4], index: 0, kind: input, shape index: {}]
  %s1 = inlined_call_operand.hbm [shape: bf16[1,2,8], index: 1, kind: output, shape index: {}]
  %s2 = sld [smem:[#allocation0]]
  $region14: #{tpu_custom_call.1} parent=0
    _
  %s4 = ssub.s32 1, %s2
  %s5 = scalar_select 0, %s4, %s2
  $region1: #{tpu_custom_call.1} parent=0
    #allocation2 [shape = 'u8[512]{0}', space=vmem, size = 0x400, scoped, tag = 'output window, operand 0, single buffered']
    #allocation3 [shape = 's32[1]{0}', space=sflag, size = 0x4, scoped, tag = 'scoped memory for tpu_custom_call.1']
    %6 = vsyncpa [#allocation3], 0
    // Predicated region
    $region2: #{tpu_custom_call.1} parent=1 // pred_check
      _
    $region3: #{tpu_custom_call.1} parent=1 // pred_check_branch
      %8 = sbr.rel (0) target = $region5
    $region4: #{tpu_custom_call.1} parent=1 // pred_region
      _
    $region5: #{tpu_custom_call.1} parent=1 // pred_fallthru
      _
    %v9 = vld [vmem:[%s0] sm:$0xff]
    %v10 = vld [vmem:[%s0 + $0x8] sm:$0xff]
    %vm11 = vcmask 31744
    %v12 = vsel %vm11, %v9, -inf
    %v13 = vrot.slane %v12, 4
    %v14 = vmax.f32 %v12, %v13
    %v15 = vrot.slane %v14, 2
    %v16 = vmax.f32 %v14, %v15
    %v17 = vrot.slane %v16, 1
    %v18 = vmax.f32 %v16, %v17
    %v19 = vsel %vm11, %v10, -inf
    %v20 = vrot.slane %v19, 4
    %v21 = vmax.f32 %v19, %v20
    %v22 = vrot.slane %v21, 2
    %v23 = vmax.f32 %v21, %v22
    %v24 = vrot.slane %v23, 1
    %v25 = vmax.f32 %v23, %v24
    %v26 = vsel %vm11, %v9, inf
    %v27 = vrot.slane %v26, 4
    %v28 = vmin.f32 %v26, %v27
    %v29 = vrot.slane %v28, 2
    %v30 = vmin.f32 %v28, %v29
    %v31 = vrot.slane %v30, 1
    %v32 = vmin.f32 %v30, %v31
    %v33 = vsel %vm11, %v10, inf
    %v34 = vrot.slane %v33, 4
    %v35 = vmin.f32 %v33, %v34
    %v36 = vrot.slane %v35, 2
    %v37 = vmin.f32 %v35, %v36
    %v38 = vrot.slane %v37, 1
    %v39 = vmin.f32 %v37, %v38
    %vm42 = vcmask 1041409
    %v43 = vsel %vm42, %v25, %v18
    %v47 = vsel %vm42, %v39, %v32
    %48 = vrot.lane.b32.xlu0 %v47, 4
    %v49 = vpop.permute.xlu0 %48
    %v51 = vsel %vm11, %v43, %v49
    %v52 = vpack.c.bf16 %v51, %v51
    %vm53 = vcmask 57344
    %54 = vst.msk [vmem:[#allocation2] sm:$0x1] %vm53, %v52
    // Predicated region
    $region6: #{tpu_custom_call.1} parent=1 // pred_check
      _
    $region7: #{tpu_custom_call.1} parent=1 // pred_check_branch
      %56 = sbr.rel (0) target = $region9
    $region8: #{tpu_custom_call.1} parent=1 // pred_region
      %s58 = ssub.s32 16, 16
      %59 = vsyncadd [#allocation3], %s58
      %s61 = sshll.u32 [#allocation2], 4
      %s62 = int_to_ptr.vmem [resolvable:$true] %s61
      %64 = dma.vmem_to_hbm [thread:$0]  %s62, 16, %s1, [#allocation3]
    $region9: #{tpu_custom_call.1} parent=1 // pred_fallthru
      _
    // Predicated region
    $region10: #{tpu_custom_call.1} parent=1 // pred_check
      _
    $region11: #{tpu_custom_call.1} parent=1 // pred_check_branch
      %66 = sbr.rel (0) target = $region13
    $region12: #{tpu_custom_call.1} parent=1 // pred_region
      %67 = dma.done [#allocation3], 16
    $region13: #{tpu_custom_call.1} parent=1 // pred_fallthru
      _
    %68 = vsyncpa [#allocation3], 1

</llo_original>
